<compile_context>
chip_gen: v7x
topology: tpu7x:2x2x1
jax: 0.10.0
libtpu: 0.0.40
codegen_flags: <defaults>
</compile_context>

<pallas_src>
import functools

import jax
import jax.numpy as jnp
from jax.experimental import pallas as pl
from jax.experimental.pallas import tpu as pltpu


def _round_up(a, b):
    return (a + b - 1) // b * b


def _ffn_kernel(x_ref, w1_ref, b1_ref, w2_ref, b2_ref, o_ref, acc_ref):
    # x_ref : (TM, d_model)      bf16 token-row tile
    # w1_ref: (d_model, Tff)     bf16 W1 chunk (columns k*Tff : (k+1)*Tff)
    # b1_ref: (1, Tff)           f32  b1 chunk
    # w2_ref: (Tff, d_model)     bf16 W2 chunk (rows    k*Tff : (k+1)*Tff)
    # b2_ref: (1, d_model)       f32  b2 (full)
    # o_ref : (TM, d_model)      output tile (resident across k)
    # acc_ref: (TM, d_model) f32 accumulator scratch
    k = pl.program_id(1)

    @pl.when(k == 0)
    def _():
        acc_ref[...] = jnp.zeros_like(acc_ref)

    # First GEMM for this d_ff chunk: (TM, d_model) @ (d_model, Tff) -> f32.
    h = jnp.dot(x_ref[...], w1_ref[...], preferred_element_type=jnp.float32)
    h = jnp.maximum(h + b1_ref[...], 0.0)          # bias + ReLU in f32
    # TODO(synk): training-mode dropout (pltpu.prng_seed/prng_random_bits mask)
    # omitted; eval-mode dropout = identity.

    # Partial second GEMM: (TM, Tff) @ (Tff, d_model), accumulate in f32.
    acc_ref[...] += jnp.dot(h.astype(w2_ref.dtype), w2_ref[...],
                            preferred_element_type=jnp.float32)

    @pl.when(k == pl.num_programs(1) - 1)
    def _():
        o_ref[...] = (acc_ref[...] + b2_ref[...]).astype(o_ref.dtype)


@functools.partial(jax.jit, static_argnames=("row_tile", "ff_tile"))
def positionwise_feed_forward(x, w1, b1, w2, b2, *, row_tile=256, ff_tile=512):
    """x: [B, S, d_model]; w1: [d_model, d_ff]; w2: [d_ff, d_model].

    d_model should ideally be a multiple of 128 (lane-dense output stores).
    Token count is padded up to the row tile; the pad rows are sliced off.
    """
    B, S, d_model = x.shape
    d_ff = w1.shape[1]
    N = B * S

    # Row tile: multiple of 128, but do not over-pad tiny inputs.
    tm = min(_round_up(row_tile, 128), _round_up(N, 128))
    # d_ff chunk: largest candidate that evenly divides d_ff, else full d_ff.
    tff = d_ff
    for cand in (ff_tile, 512, 256, 128):
        if cand <= d_ff and d_ff % cand == 0:
            tff = cand
            break

    n_pad = _round_up(N, tm)
    compute_dtype = jnp.bfloat16

    x2 = x.reshape(N, d_model).astype(compute_dtype)
    if n_pad != N:
        x2 = jnp.pad(x2, ((0, n_pad - N), (0, 0)))
    w1c = w1.astype(compute_dtype)
    w2c = w2.astype(compute_dtype)
    b1_2d = b1.reshape(1, d_ff).astype(jnp.float32)
    b2_2d = b2.reshape(1, d_model).astype(jnp.float32)

    grid = (n_pad // tm, d_ff // tff)

    out_bytes = n_pad * d_model * jnp.dtype(x.dtype).itemsize
    bytes_accessed = (x2.size * x2.dtype.itemsize
                      + w1c.size * w1c.dtype.itemsize
                      + w2c.size * w2c.dtype.itemsize
                      + b1_2d.size * 4 + b2_2d.size * 4 + out_bytes)
    flops = 4 * n_pad * d_model * d_ff   # two GEMMs, 2*M*K*N each

    out = pl.pallas_call(
        _ffn_kernel,
        out_shape=jax.ShapeDtypeStruct((n_pad, d_model), x.dtype),
        grid_spec=pltpu.PrefetchScalarGridSpec(
            num_scalar_prefetch=0,
            grid=grid,
            in_specs=[
                pl.BlockSpec((tm, d_model), lambda i, k: (i, 0)),    # x tile
                pl.BlockSpec((d_model, tff), lambda i, k: (0, k)),   # W1 chunk
                pl.BlockSpec((1, tff), lambda i, k: (0, k)),         # b1 chunk
                pl.BlockSpec((tff, d_model), lambda i, k: (k, 0)),   # W2 chunk
                pl.BlockSpec((1, d_model), lambda i, k: (0, 0)),     # b2 (tiny)
            ],
            out_specs=pl.BlockSpec((tm, d_model), lambda i, k: (i, 0)),
            scratch_shapes=[pltpu.VMEM((tm, d_model), jnp.float32)],
        ),
        compiler_params=pltpu.CompilerParams(
            dimension_semantics=("parallel", "arbitrary"),
            # Fits the default tiling with headroom; stays under v7x's 64 MiB.
            vmem_limit_bytes=48 * 1024 * 1024,
        ),
        cost_estimate=pl.CostEstimate(
            flops=flops, transcendentals=0, bytes_accessed=bytes_accessed),
    )(x2, w1c, b1_2d, w2c, b2_2d)

    return out[:N].reshape(B, S, d_model)


def _init_linear(key, in_features, out_features, dtype=jnp.float32):
    """Deterministic PyTorch-style Linear init; weight returned as [in, out]."""
    kw, kb = jax.random.split(key)
    bound = 1.0 / (in_features ** 0.5)
    # PyTorch stores weight as [out, in]; we keep the transpose [in, out].
    w = jax.random.uniform(kw, (in_features, out_features), dtype,
                           minval=-bound, maxval=bound)
    b = jax.random.uniform(kb, (out_features,), dtype,
                           minval=-bound, maxval=bound)
    return w, b


if __name__ == "__main__":
    key = jax.random.PRNGKey(0)
    k_x, k_w1, k_w2 = jax.random.split(key, 3)

    # Small but lane-friendly shapes (d_model, d_ff multiples of 128).
    B, S, d_model, d_ff = 2, 8, 128, 512
    x = jax.random.normal(k_x, (B, S, d_model), jnp.float32)
    w1, b1 = _init_linear(k_w1, d_model, d_ff)
    w2, b2 = _init_linear(k_w2, d_ff, d_model)

    out = positionwise_feed_forward(x, w1, b1, w2, b2)
    out = jax.block_until_ready(out)

    # Reference in plain JAX with matching bf16 matmul inputs / f32 accumulation
    # (eval-mode dropout = identity).
    xb = x.astype(jnp.bfloat16)
    w1b = w1.astype(jnp.bfloat16)
    w2b = w2.astype(jnp.bfloat16)
    h_ref = jnp.maximum(
        jnp.dot(xb.reshape(B * S, d_model), w1b,
                preferred_element_type=jnp.float32) + b1, 0.0)
    ref = (jnp.dot(h_ref.astype(jnp.bfloat16), w2b,
                   preferred_element_type=jnp.float32) + b2)
    ref = ref.reshape(B, S, d_model).astype(x.dtype)

    assert out.shape == (B, S, d_model)
    assert jnp.allclose(out, ref, atol=1e-2, rtol=1e-2), (
        float(jnp.max(jnp.abs(out - ref))))

    print("KERNEL_OK")
</pallas_src>

<mosaic_0001>
module attributes {stable_mosaic.version = 11 : i64} {
  func.func @_ffn_kernel(%arg0: i32, %arg1: i32, %arg2: memref<128x128xbf16, #tpu.memory_space<vmem>>, %arg3: memref<128x512xbf16, #tpu.memory_space<vmem>>, %arg4: memref<1x512xf32, #tpu.memory_space<vmem>>, %arg5: memref<512x128xbf16, #tpu.memory_space<vmem>>, %arg6: memref<1x128xf32, #tpu.memory_space<vmem>>, %arg7: memref<128x128xf32, #tpu.memory_space<vmem>>, %arg8: memref<128x128xf32, #tpu.memory_space<vmem>>) attributes {dimension_semantics = [#tpu.dimension_semantics<parallel>, #tpu.dimension_semantics<arbitrary>], iteration_bounds = array<i64: 1, 1>, scalar_prefetch = 0 : i64, scratch_operands = 1 : i64, tpu.core_type = #tpu.core_type<tc>, window_params = [{transform_indices = @transform_0, window_bounds = array<i64: 128, 128>}, {transform_indices = @transform_1, window_bounds = array<i64: 128, 512>}, {transform_indices = @transform_2, window_bounds = array<i64: 1, 512>}, {transform_indices = @transform_3, window_bounds = array<i64: 512, 128>}, {pipeline_mode = #tpu.pipeline_mode<synchronous>, transform_indices = @transform_4, window_bounds = array<i64: 1, 128>}, {transform_indices = @transform_5, window_bounds = array<i64: 128, 128>}]} {
    %c0_i32 = arith.constant 0 : i32
    %0 = arith.cmpi eq, %arg1, %c0_i32 : i32
    %1 = arith.extui %0 : i1 to i32
    %c0_i32_0 = arith.constant 0 : i32
    %2 = arith.cmpi ne, %1, %c0_i32_0 : i32
    scf.if %2 {
      %cst_16 = arith.constant 0.000000e+00 : f32
      %20 = vector.broadcast %cst_16 : f32 to vector<128x128xf32>
      %c0_17 = arith.constant 0 : index
      %c0_18 = arith.constant 0 : index
      %21 = vector.load %arg8[%c0_17, %c0_18] : memref<128x128xf32, #tpu.memory_space<vmem>>, vector<128x128xf32>
      tpu.vector_store %arg8[%c0_17, %c0_18], %20 {strides = array<i32>} : memref<128x128xf32, #tpu.memory_space<vmem>>, vector<128x128xf32>,
    } else {
    }
    %c0 = arith.constant 0 : index
    %c0_1 = arith.constant 0 : index
    %3 = vector.load %arg2[%c0, %c0_1] : memref<128x128xbf16, #tpu.memory_space<vmem>>, vector<128x128xbf16>
    %c0_2 = arith.constant 0 : index
    %c0_3 = arith.constant 0 : index
    %4 = vector.load %arg3[%c0_2, %c0_3] : memref<128x512xbf16, #tpu.memory_space<vmem>>, vector<128x512xbf16>
    %cst = arith.constant dense<0.000000e+00> : vector<128x512xf32>
    %5 = tpu.matmul %3, %4, %cst {dimension_numbers = #tpu.dot_dimension_numbers<[1], [0], [0], [1], [0, 0, 1, 1], [], []>} : vector<128x128xbf16>, vector<128x512xbf16>, vector<128x512xf32> -> vector<128x512xf32>
    %c0_4 = arith.constant 0 : index
    %c0_5 = arith.constant 0 : index
    %6 = vector.load %arg4[%c0_4, %c0_5] : memref<1x512xf32, #tpu.memory_space<vmem>>, vector<1x512xf32>
    %7 = vector.broadcast %6 : vector<1x512xf32> to vector<128x512xf32>
    %8 = arith.addf %5, %7 : vector<128x512xf32>
    %cst_6 = arith.constant 0.000000e+00 : f32
    %9 = vector.broadcast %cst_6 : f32 to vector<128x512xf32>
    %10 = arith.maximumf %8, %9 : vector<128x512xf32>
    %c0_7 = arith.constant 0 : index
    %c0_8 = arith.constant 0 : index
    %11 = vector.load %arg8[%c0_7, %c0_8] : memref<128x128xf32, #tpu.memory_space<vmem>>, vector<128x128xf32>
    %12 = arith.truncf %10 : vector<128x512xf32> to vector<128x512xbf16>
    %c0_9 = arith.constant 0 : index
    %c0_10 = arith.constant 0 : index
    %13 = vector.load %arg5[%c0_9, %c0_10] : memref<512x128xbf16, #tpu.memory_space<vmem>>, vector<512x128xbf16>
    %cst_11 = arith.constant dense<0.000000e+00> : vector<128x128xf32>
    %14 = tpu.matmul %12, %13, %cst_11 {dimension_numbers = #tpu.dot_dimension_numbers<[1], [0], [0], [1], [0, 0, 1, 1], [], []>} : vector<128x512xbf16>, vector<512x128xbf16>, vector<128x128xf32> -> vector<128x128xf32>
    %15 = arith.addf %11, %14 : vector<128x128xf32>
    %c0_12 = arith.constant 0 : index
    %c0_13 = arith.constant 0 : index
    %16 = vector.load %arg8[%c0_12, %c0_13] : memref<128x128xf32, #tpu.memory_space<vmem>>, vector<128x128xf32>
    tpu.vector_store %arg8[%c0_12, %c0_13], %15 {strides = array<i32>} : memref<128x128xf32, #tpu.memory_space<vmem>>, vector<128x128xf32>,
    %c0_i32_14 = arith.constant 0 : i32
    %17 = arith.cmpi eq, %arg1, %c0_i32_14 : i32
    %18 = arith.extui %17 : i1 to i32
    %c0_i32_15 = arith.constant 0 : i32
    %19 = arith.cmpi ne, %18, %c0_i32_15 : i32
    scf.if %19 {
      %c0_16 = arith.constant 0 : index
      %c0_17 = arith.constant 0 : index
      %20 = vector.load %arg8[%c0_16, %c0_17] : memref<128x128xf32, #tpu.memory_space<vmem>>, vector<128x128xf32>
      %c0_18 = arith.constant 0 : index
      %c0_19 = arith.constant 0 : index
      %21 = vector.load %arg6[%c0_18, %c0_19] : memref<1x128xf32, #tpu.memory_space<vmem>>, vector<1x128xf32>
      %22 = vector.broadcast %21 : vector<1x128xf32> to vector<128x128xf32>
      %23 = arith.addf %20, %22 : vector<128x128xf32>
      %c0_20 = arith.constant 0 : index
      %c0_21 = arith.constant 0 : index
      %24 = vector.load %arg7[%c0_20, %c0_21] : memref<128x128xf32, #tpu.memory_space<vmem>>, vector<128x128xf32>
      tpu.vector_store %arg7[%c0_20, %c0_21], %23 {strides = array<i32>} : memref<128x128xf32, #tpu.memory_space<vmem>>, vector<128x128xf32>,
    } else {
    }
    return
  }
  func.func @transform_0(%arg0: i32, %arg1: i32) -> (i32, i32) {
    %c0_i32 = arith.constant 0 : i32
    %c0_i32_0 = arith.constant 0 : i32
    return %arg0, %c0_i32 : i32, i32
  }
  func.func @transform_1(%arg0: i32, %arg1: i32) -> (i32, i32) {
    %c0_i32 = arith.constant 0 : i32
    %c0_i32_0 = arith.constant 0 : i32
    return %c0_i32, %arg1 : i32, i32
  }
  func.func @transform_2(%arg0: i32, %arg1: i32) -> (i32, i32) {
    %c0_i32 = arith.constant 0 : i32
    %c0_i32_0 = arith.constant 0 : i32
    return %c0_i32, %arg1 : i32, i32
  }
  func.func @transform_3(%arg0: i32, %arg1: i32) -> (i32, i32) {
    %c0_i32 = arith.constant 0 : i32
    %c0_i32_0 = arith.constant 0 : i32
    return %arg1, %c0_i32 : i32, i32
  }
  func.func @transform_4(%arg0: i32, %arg1: i32) -> (i32, i32) {
    %c0_i32 = arith.constant 0 : i32
    %c0_i32_0 = arith.constant 0 : i32
    %c0_i32_1 = arith.constant 0 : i32
    return %c0_i32, %c0_i32_0 : i32, i32
  }
  func.func @transform_5(%arg0: i32, %arg1: i32) -> (i32, i32) {
    %c0_i32 = arith.constant 0 : i32
    %c0_i32_0 = arith.constant 0 : i32
    return %arg0, %c0_i32 : i32, i32
  }
}

</mosaic_0001>

<llo_original>
// kernel: positionwise_feed_forward.1
$region0: #{positionwise_feed_forward.1}
  #allocation0 [shape = 'u32[]', space=smem, size = 0x4, offset = 0x4, fixed_abs, tag = 'smem constant byte address 0x4 - core index']
  #allocation1 [shape = 'u32[144,128]{1,0:T(1,128)}', space=vmem, size = 0x12000, scoped, tag = 'internal scratch']
  #allocation2 [shape = 'f32[128,128]{1,0:T(8,128)}', space=vmem, size = 0x10000, scoped, tag = 'scratch operand']
  %s0 = inlined_call_operand.vmem [shape: bf16[128,128], index: 0, kind: input, shape index: {}]
  %s1 = inlined_call_operand.vmem [shape: bf16[128,512], index: 1, kind: input, shape index: {}]
  %s2 = inlined_call_operand.vmem [shape: f32[1,512], index: 2, kind: input, shape index: {}]
  %s3 = inlined_call_operand.vmem [shape: bf16[512,128], index: 3, kind: input, shape index: {}]
  %s4 = inlined_call_operand.vmem [shape: f32[1,128], index: 4, kind: input, shape index: {}]
  %s5 = inlined_call_operand.vmem [shape: f32[128,128], index: 5, kind: output, shape index: {}]
  %s6 = sld [smem:[#allocation0]]
  $region38: #{positionwise_feed_forward.1} parent=0
    _
  %s8 = ssub.s32 1, %s6
  %s9 = scalar_select 0, %s8, %s6
  // Predicated region
  $region2: #{positionwise_feed_forward.1} parent=0 // pred_check
    _
  $region3: #{positionwise_feed_forward.1} parent=0 // pred_check_branch
    %11 = sbr.rel (0) target = $region5
  $region4: #{positionwise_feed_forward.1} parent=0 // pred_region
    _
  $region5: #{positionwise_feed_forward.1} parent=0 // pred_fallthru
    _
  // Predicated region
  $region6: #{positionwise_feed_forward.1} parent=0 // pred_check
    _
  $region7: #{positionwise_feed_forward.1} parent=0 // pred_check_branch
    %13 = sbr.rel (0) target = $region9
  $region8: #{positionwise_feed_forward.1} parent=0 // pred_region
    _
  $region9: #{positionwise_feed_forward.1} parent=0 // pred_fallthru
    _
  // Predicated region
  $region10: #{positionwise_feed_forward.1} parent=0 // pred_check
    _
  $region11: #{positionwise_feed_forward.1} parent=0 // pred_check_branch
    %15 = sbr.rel (0) target = $region13
  $region12: #{positionwise_feed_forward.1} parent=0 // pred_region
    _
  $region13: #{positionwise_feed_forward.1} parent=0 // pred_fallthru
    _
  // Predicated region
  $region14: #{positionwise_feed_forward.1} parent=0 // pred_check
    _
  $region15: #{positionwise_feed_forward.1} parent=0 // pred_check_branch
    %17 = sbr.rel (0) target = $region17
  $region16: #{positionwise_feed_forward.1} parent=0 // pred_region
    _
  $region17: #{positionwise_feed_forward.1} parent=0 // pred_fallthru
    _
  // Predicated region
  $region18: #{positionwise_feed_forward.1} parent=0 // pred_check
    _
  $region19: #{positionwise_feed_forward.1} parent=0 // pred_check_branch
    %19 = sbr.rel (0) target = $region21
  $region20: #{positionwise_feed_forward.1} parent=0 // pred_region
    _
  $region21: #{positionwise_feed_forward.1} parent=0 // pred_fallthru
    _
  %p21 = scmp.eq.s32.totalorder 0, 0
  // Predicated region
  $region22: #{positionwise_feed_forward.1} parent=0 // pred_check
    %p22 = pneg %p21
  $region23: #{positionwise_feed_forward.1} parent=0 // pred_check_branch
    %24 = sbr.rel (%p22) target = $region25
  $region24: #{positionwise_feed_forward.1} parent=0 // pred_region
    %25 = vst [vmem:[#allocation2] sm:$0xff] 0.0
    %26 = vst [vmem:[#allocation2 + $0x8] sm:$0xff] 0.0
    %27 = vst [vmem:[#allocation2 + $0x10] sm:$0xff] 0.0
    %28 = vst [vmem:[#allocation2 + $0x18] sm:$0xff] 0.0
    %29 = vst [vmem:[#allocation2 + $0x20] sm:$0xff] 0.0
    %30 = vst [vmem:[#allocation2 + $0x28] sm:$0xff] 0.0
    %31 = vst [vmem:[#allocation2 + $0x30] sm:$0xff] 0.0
    %32 = vst [vmem:[#allocation2 + $0x38] sm:$0xff] 0.0
    %33 = vst [vmem:[#allocation2 + $0x40] sm:$0xff] 0.0
    %34 = vst [vmem:[#allocation2 + $0x48] sm:$0xff] 0.0
    %35 = vst [vmem:[#allocation2 + $0x50] sm:$0xff] 0.0
    %36 = vst [vmem:[#allocation2 + $0x58] sm:$0xff] 0.0
    %37 = vst [vmem:[#allocation2 + $0x60] sm:$0xff] 0.0
    %38 = vst [vmem:[#allocation2 + $0x68] sm:$0xff] 0.0
    %39 = vst [vmem:[#allocation2 + $0x70] sm:$0xff] 0.0
    %40 = vst [vmem:[#allocation2 + $0x78] sm:$0xff] 0.0
  $region25: #{positionwise_feed_forward.1} parent=0 // pred_fallthru
    _
  %v41 = vld [vmem:[%s0] sm:$0xf]
  %v42 = vld [vmem:[%s0 + $0x4] sm:$0xf]
  %v43 = vld [vmem:[%s0 + $0x8] sm:$0xf]
  %v44 = vld [vmem:[%s0 + $0xc] sm:$0xf]
  %v45 = vld [vmem:[%s0 + $0x10] sm:$0xf]
  %v46 = vld [vmem:[%s0 + $0x14] sm:$0xf]
  %v47 = vld [vmem:[%s0 + $0x18] sm:$0xf]
  %v48 = vld [vmem:[%s0 + $0x1c] sm:$0xf]
  %v49 = vld [vmem:[%s0 + $0x20] sm:$0xf]
  %v50 = vld [vmem:[%s0 + $0x24] sm:$0xf]
  %v51 = vld [vmem:[%s0 + $0x28] sm:$0xf]
  %v52 = vld [vmem:[%s0 + $0x2c] sm:$0xf]
  %v53 = vld [vmem:[%s0 + $0x30] sm:$0xf]
  %v54 = vld [vmem:[%s0 + $0x34] sm:$0xf]
  %v55 = vld [vmem:[%s0 + $0x38] sm:$0xf]
  %v56 = vld [vmem:[%s0 + $0x3c] sm:$0xf]
  %v57 = vld [vmem:[%s1] sm:$0xff]
  %v58 = vld [vmem:[%s1 + $0x8] sm:$0xff]
  %v59 = vld [vmem:[%s1 + $0x10] sm:$0xff]
  %v60 = vld [vmem:[%s1 + $0x18] sm:$0xff]
  %v61 = vld [vmem:[%s1 + $0x20] sm:$0xff]
  %v62 = vld [vmem:[%s1 + $0x28] sm:$0xff]
  %v63 = vld [vmem:[%s1 + $0x30] sm:$0xff]
  %v64 = vld [vmem:[%s1 + $0x38] sm:$0xff]
  %v65 = vld [vmem:[%s1 + $0x40] sm:$0xff]
  %v66 = vld [vmem:[%s1 + $0x48] sm:$0xff]
  %v67 = vld [vmem:[%s1 + $0x50] sm:$0xff]
  %v68 = vld [vmem:[%s1 + $0x58] sm:$0xff]
  %v69 = vld [vmem:[%s1 + $0x60] sm:$0xff]
  %v70 = vld [vmem:[%s1 + $0x68] sm:$0xff]
  %v71 = vld [vmem:[%s1 + $0x70] sm:$0xff]
  %v72 = vld [vmem:[%s1 + $0x78] sm:$0xff]
  %v73 = vld [vmem:[%s1 + $0x80] sm:$0xff]
  %v74 = vld [vmem:[%s1 + $0x88] sm:$0xff]
  %v75 = vld [vmem:[%s1 + $0x90] sm:$0xff]
  %v76 = vld [vmem:[%s1 + $0x98] sm:$0xff]
  %v77 = vld [vmem:[%s1 + $0xa0] sm:$0xff]
  %v78 = vld [vmem:[%s1 + $0xa8] sm:$0xff]
  %v79 = vld [vmem:[%s1 + $0xb0] sm:$0xff]
  %v80 = vld [vmem:[%s1 + $0xb8] sm:$0xff]
  %v81 = vld [vmem:[%s1 + $0xc0] sm:$0xff]
  %v82 = vld [vmem:[%s1 + $0xc8] sm:$0xff]
  %v83 = vld [vmem:[%s1 + $0xd0] sm:$0xff]
  %v84 = vld [vmem:[%s1 + $0xd8] sm:$0xff]
  %v85 = vld [vmem:[%s1 + $0xe0] sm:$0xff]
  %v86 = vld [vmem:[%s1 + $0xe8] sm:$0xff]
  %v87 = vld [vmem:[%s1 + $0xf0] sm:$0xff]
  %v88 = vld [vmem:[%s1 + $0xf8] sm:$0xff]
  %v89 = vld [vmem:[%s2] sm:$0xf]
  %v91 = vlaneseq
  %v92 = vshrl.u32 %v91, 7
  %v93 = vsub.s32 0, %v92
  %v94 = vrot.slane %v89, %v93
  %v95 = vlaneseq
  %v96 = vshrl.u32 %v95, 7
  %v97 = vsub.s32 1, %v96
  %v98 = vrot.slane %v89, %v97
  %v99 = vlaneseq
  %v100 = vshrl.u32 %v99, 7
  %v101 = vsub.s32 2, %v100
  %v102 = vrot.slane %v89, %v101
  %v103 = vlaneseq
  %v104 = vshrl.u32 %v103, 7
  %v105 = vsub.s32 3, %v104
  %v106 = vrot.slane %v89, %v105
  %v127 = vunpack.c.l.b16 %v41
  %v128 = vunpack.c.l.b16 %v42
  %v129 = vunpack.c.l.b16 %v43
  %v130 = vunpack.c.l.b16 %v44
  %v131 = vunpack.c.l.b16 %v45
  %v132 = vunpack.c.l.b16 %v46
  %v133 = vunpack.c.l.b16 %v47
  %v134 = vunpack.c.l.b16 %v48
  %v135 = vunpack.c.l.b16 %v49
  %v136 = vunpack.c.l.b16 %v50
  %v137 = vunpack.c.l.b16 %v51
  %v138 = vunpack.c.l.b16 %v52
  %v139 = vunpack.c.l.b16 %v53
  %v140 = vunpack.c.l.b16 %v54
  %v141 = vunpack.c.l.b16 %v55
  %v142 = vunpack.c.l.b16 %v56
  %v143 = vpack.c.b16 %v128, %v127
  %v144 = vpack.c.b16 %v130, %v129
  %v145 = vpack.c.b16 %v132, %v131
  %v146 = vpack.c.b16 %v134, %v133
  %v147 = vpack.c.b16 %v136, %v135
  %v148 = vpack.c.b16 %v138, %v137
  %v149 = vpack.c.b16 %v140, %v139
  %v150 = vpack.c.b16 %v142, %v141
  %v191 = vunpack.c.l.b16 %v57
  %v192 = vunpack.c.h.b16 %v57
  %v193 = vunpack.c.l.b16 %v58
  %v194 = vunpack.c.h.b16 %v58
  %v195 = vunpack.c.l.b16 %v59
  %v196 = vunpack.c.h.b16 %v59
  %v197 = vunpack.c.l.b16 %v60
  %v198 = vunpack.c.h.b16 %v60
  %v199 = vunpack.c.l.b16 %v61
  %v200 = vunpack.c.h.b16 %v61
  %v201 = vunpack.c.l.b16 %v62
  %v202 = vunpack.c.h.b16 %v62
  %v203 = vunpack.c.l.b16 %v63
  %v204 = vunpack.c.h.b16 %v63
  %v205 = vunpack.c.l.b16 %v64
  %v206 = vunpack.c.h.b16 %v64
  %v207 = vunpack.c.l.b16 %v65
  %v208 = vunpack.c.h.b16 %v65
  %v209 = vunpack.c.l.b16 %v66
  %v210 = vunpack.c.h.b16 %v66
  %v211 = vunpack.c.l.b16 %v67
  %v212 = vunpack.c.h.b16 %v67
  %v213 = vunpack.c.l.b16 %v68
  %v214 = vunpack.c.h.b16 %v68
  %v215 = vunpack.c.l.b16 %v69
  %v216 = vunpack.c.h.b16 %v69
  %v217 = vunpack.c.l.b16 %v70
  %v218 = vunpack.c.h.b16 %v70
  %v219 = vunpack.c.l.b16 %v71
  %v220 = vunpack.c.h.b16 %v71
  %v221 = vunpack.c.l.b16 %v72
  %v222 = vunpack.c.h.b16 %v72
  %v223 = vunpack.c.l.b16 %v73
  %v224 = vunpack.c.h.b16 %v73
  %v225 = vunpack.c.l.b16 %v74
  %v226 = vunpack.c.h.b16 %v74
  %v227 = vunpack.c.l.b16 %v75
  %v228 = vunpack.c.h.b16 %v75
  %v229 = vunpack.c.l.b16 %v76
  %v230 = vunpack.c.h.b16 %v76
  %v231 = vunpack.c.l.b16 %v77
  %v232 = vunpack.c.h.b16 %v77
  %v233 = vunpack.c.l.b16 %v78
  %v234 = vunpack.c.h.b16 %v78
  %v235 = vunpack.c.l.b16 %v79
  %v236 = vunpack.c.h.b16 %v79
  %v237 = vunpack.c.l.b16 %v80
  %v238 = vunpack.c.h.b16 %v80
  %v239 = vunpack.c.l.b16 %v81
  %v240 = vunpack.c.h.b16 %v81
  %v241 = vunpack.c.l.b16 %v82
  %v242 = vunpack.c.h.b16 %v82
  %v243 = vunpack.c.l.b16 %v83
  %v244 = vunpack.c.h.b16 %v83
  %v245 = vunpack.c.l.b16 %v84
  %v246 = vunpack.c.h.b16 %v84
  %v247 = vunpack.c.l.b16 %v85
  %v248 = vunpack.c.h.b16 %v85
  %v249 = vunpack.c.l.b16 %v86
  %v250 = vunpack.c.h.b16 %v86
  %v251 = vunpack.c.l.b16 %v87
  %v252 = vunpack.c.h.b16 %v87
  %v253 = vunpack.c.l.b16 %v88
  %v254 = vunpack.c.h.b16 %v88
  %v255 = vpack.c.b16 %v195, %v191
  %v256 = vpack.c.b16 %v196, %v192
  %v257 = vpack.c.b16 %v197, %v193
  %v258 = vpack.c.b16 %v198, %v194
  %v259 = vpack.c.b16 %v203, %v199
  %v260 = vpack.c.b16 %v204, %v200
  %v261 = vpack.c.b16 %v205, %v201
  %v262 = vpack.c.b16 %v206, %v202
  %v263 = vpack.c.b16 %v211, %v207
  %v264 = vpack.c.b16 %v212, %v208
  %v265 = vpack.c.b16 %v213, %v209
  %v266 = vpack.c.b16 %v214, %v210
  %v267 = vpack.c.b16 %v219, %v215
  %v268 = vpack.c.b16 %v220, %v216
  %v269 = vpack.c.b16 %v221, %v217
  %v270 = vpack.c.b16 %v222, %v218
  %v271 = vpack.c.b16 %v227, %v223
  %v272 = vpack.c.b16 %v228, %v224
  %v273 = vpack.c.b16 %v229, %v225
  %v274 = vpack.c.b16 %v230, %v226
  %v275 = vpack.c.b16 %v235, %v231
  %v276 = vpack.c.b16 %v236, %v232
  %v277 = vpack.c.b16 %v237, %v233
  %v278 = vpack.c.b16 %v238, %v234
  %v279 = vpack.c.b16 %v243, %v239
  %v280 = vpack.c.b16 %v244, %v240
  %v281 = vpack.c.b16 %v245, %v241
  %v282 = vpack.c.b16 %v246, %v242
  %v283 = vpack.c.b16 %v251, %v247
  %v284 = vpack.c.b16 %v252, %v248
  %v285 = vpack.c.b16 %v253, %v249
  %v286 = vpack.c.b16 %v254, %v250
  %319 = vmatprep.subr.bf16.mxu0 %v256
  %320 = vmatpush1.bf16.msra.mxu0 %v255
  %321 = vmatprep.subr.bf16.mxu0 %v260
  %322 = vmatpush1.bf16.msra.mxu0 %v259
  %323 = vmatprep.subr.bf16.mxu0 %v264
  %324 = vmatpush1.bf16.msra.mxu0 %v263
  %325 = vmatprep.subr.bf16.mxu0 %v268
  %326 = vmatpush1.bf16.msra.mxu0 %v267
  %327 = vmatprep.subr.bf16.mxu0 %v272
  %328 = vmatpush1.bf16.msra.mxu0 %v271
  %329 = vmatprep.subr.bf16.mxu0 %v276
  %330 = vmatpush1.bf16.msra.mxu0 %v275
  %331 = vmatprep.subr.bf16.mxu0 %v280
  %332 = vmatpush1.bf16.msra.mxu0 %v279
  %333 = vmatprep.subr.bf16.mxu0 %v284
  %334 = vmatpush1.bf16.msra.mxu0 %v283
  %335 = vmatprep.subr.bf16.mxu0 0
  %336 = vmatpush1.bf16.msra.mxu0 0
  %337 = vmatprep.subr.bf16.mxu0 0
  %338 = vmatpush1.bf16.msra.mxu0 0
  %339 = vmatprep.subr.bf16.mxu0 0
  %340 = vmatpush1.bf16.msra.mxu0 0
  %341 = vmatprep.subr.bf16.mxu0 0
  %342 = vmatpush1.bf16.msra.mxu0 0
  %343 = vmatprep.subr.bf16.mxu0 0
  %344 = vmatpush1.bf16.msra.mxu0 0
  %345 = vmatprep.subr.bf16.mxu0 0
  %346 = vmatpush1.bf16.msra.mxu0 0
  %347 = vmatprep.subr.bf16.mxu0 0
  %348 = vmatpush1.bf16.msra.mxu0 0
  %349 = vmatprep.subr.bf16.mxu0 0
  %350 = vmatpush1.bf16.msra.mxu0 0
  %351 = vmatprep.mubr.bf16.mxu0 0
  %352 = vmatmul.mubr.bf16.gmra.mrb[0].mxu0 %v143
  %v353 = vpop.f32.mrb[0].mxu0
  %v354 = vadd.f32 %v94, %v353
  %v355 = vpop.f32.mrb[0].mxu0
  %v356 = vadd.f32 %v98, %v355
  %v357 = vpop.f32.mrb[0].mxu0
  %v358 = vadd.f32 %v94, %v357
  %v359 = vpop.f32.mrb[0].mxu0
  %v360 = vadd.f32 %v98, %v359
  %361 = vmatprep.mubr.bf16.mxu0 0
  %362 = vmatmul.mubr.bf16.gmra.mrb[0].mxu0 %v144
  %v363 = vpop.f32.mrb[0].mxu0
  %v364 = vadd.f32 %v94, %v363
  %v365 = vpop.f32.mrb[0].mxu0
  %v366 = vadd.f32 %v98, %v365
  %v367 = vpop.f32.mrb[0].mxu0
  %v368 = vadd.f32 %v94, %v367
  %v369 = vpop.f32.mrb[0].mxu0
  %v370 = vadd.f32 %v98, %v369
  %371 = vmatprep.mubr.bf16.mxu0 0
  %372 = vmatmul.mubr.bf16.gmra.mrb[0].mxu0 %v145
  %v373 = vpop.f32.mrb[0].mxu0
  %v374 = vadd.f32 %v94, %v373
  %v375 = vpop.f32.mrb[0].mxu0
  %v376 = vadd.f32 %v98, %v375
  %v377 = vpop.f32.mrb[0].mxu0
  %v378 = vadd.f32 %v94, %v377
  %v379 = vpop.f32.mrb[0].mxu0
  %v380 = vadd.f32 %v98, %v379
  %381 = vmatprep.mubr.bf16.mxu0 0
  %382 = vmatmul.mubr.bf16.gmra.mrb[0].mxu0 %v146
  %v383 = vpop.f32.mrb[0].mxu0
  %v384 = vadd.f32 %v94, %v383
  %v385 = vpop.f32.mrb[0].mxu0
  %v386 = vadd.f32 %v98, %v385
  %v387 = vpop.f32.mrb[0].mxu0
  %v388 = vadd.f32 %v94, %v387
  %v389 = vpop.f32.mrb[0].mxu0
  %v390 = vadd.f32 %v98, %v389
  %391 = vmatprep.mubr.bf16.mxu0 0
  %392 = vmatmul.mubr.bf16.gmra.mrb[0].mxu0 %v147
  %v393 = vpop.f32.mrb[0].mxu0
  %v394 = vadd.f32 %v94, %v393
  %v395 = vpop.f32.mrb[0].mxu0
  %v396 = vadd.f32 %v98, %v395
  %v397 = vpop.f32.mrb[0].mxu0
  %v398 = vadd.f32 %v94, %v397
  %v399 = vpop.f32.mrb[0].mxu0
  %v400 = vadd.f32 %v98, %v399
  %401 = vmatprep.mubr.bf16.mxu0 0
  %402 = vmatmul.mubr.bf16.gmra.mrb[0].mxu0 %v148
  %v403 = vpop.f32.mrb[0].mxu0
  %v404 = vadd.f32 %v94, %v403
  %v405 = vpop.f32.mrb[0].mxu0
  %v406 = vadd.f32 %v98, %v405
  %v407 = vpop.f32.mrb[0].mxu0
  %v408 = vadd.f32 %v94, %v407
  %v409 = vpop.f32.mrb[0].mxu0
  %v410 = vadd.f32 %v98, %v409
  %411 = vmatprep.mubr.bf16.mxu0 0
  %412 = vmatmul.mubr.bf16.gmra.mrb[0].mxu0 %v149
  %v413 = vpop.f32.mrb[0].mxu0
  %v414 = vadd.f32 %v94, %v413
  %v415 = vpop.f32.mrb[0].mxu0
  %v416 = vadd.f32 %v98, %v415
  %v417 = vpop.f32.mrb[0].mxu0
  %v418 = vadd.f32 %v94, %v417
  %v419 = vpop.f32.mrb[0].mxu0
  %v420 = vadd.f32 %v98, %v419
  %421 = vmatprep.mubr.bf16.mxu0 0
  %422 = vmatmul.mubr.bf16.gmra.mrb[0].mxu0 %v150
  %v423 = vpop.f32.mrb[0].mxu0
  %v424 = vadd.f32 %v94, %v423
  %v425 = vpop.f32.mrb[0].mxu0
  %v426 = vadd.f32 %v98, %v425
  %v427 = vpop.f32.mrb[0].mxu0
  %v428 = vadd.f32 %v94, %v427
  %v429 = vpop.f32.mrb[0].mxu0
  %v430 = vadd.f32 %v98, %v429
  %431 = vdwg.mxu0
  %432 = vmatprep.subr.bf16.mxu0 %v258
  %433 = vmatpush1.bf16.msra.mxu0 %v257
  %434 = vmatprep.subr.bf16.mxu0 %v262
  %435 = vmatpush1.bf16.msra.mxu0 %v261
  %436 = vmatprep.subr.bf16.mxu0 %v266
  %437 = vmatpush1.bf16.msra.mxu0 %v265
  %438 = vmatprep.subr.bf16.mxu0 %v270
  %439 = vmatpush1.bf16.msra.mxu0 %v269
  %440 = vmatprep.subr.bf16.mxu0 %v274
  %441 = vmatpush1.bf16.msra.mxu0 %v273
  %442 = vmatprep.subr.bf16.mxu0 %v278
  %443 = vmatpush1.bf16.msra.mxu0 %v277
  %444 = vmatprep.subr.bf16.mxu0 %v282
  %445 = vmatpush1.bf16.msra.mxu0 %v281
  %446 = vmatprep.subr.bf16.mxu0 %v286
  %447 = vmatpush1.bf16.msra.mxu0 %v285
  %448 = vmatprep.subr.bf16.mxu0 0
  %449 = vmatpush1.bf16.msra.mxu0 0
  %450 = vmatprep.subr.bf16.mxu0 0
  %451 = vmatpush1.bf16.msra.mxu0 0
  %452 = vmatprep.subr.bf16.mxu0 0
  %453 = vmatpush1.bf16.msra.mxu0 0
  %454 = vmatprep.subr.bf16.mxu0 0
  %455 = vmatpush1.bf16.msra.mxu0 0
  %456 = vmatprep.subr.bf16.mxu0 0
  %457 = vmatpush1.bf16.msra.mxu0 0
  %458 = vmatprep.subr.bf16.mxu0 0
  %459 = vmatpush1.bf16.msra.mxu0 0
  %460 = vmatprep.subr.bf16.mxu0 0
  %461 = vmatpush1.bf16.msra.mxu0 0
  %462 = vmatprep.subr.bf16.mxu0 0
  %463 = vmatpush1.bf16.msra.mxu0 0
  %464 = vmatprep.mubr.bf16.mxu0 0
  %465 = vmatmul.mubr.bf16.gmra.mrb[0].mxu0 %v143
  %v466 = vpop.f32.mrb[0].mxu0
  %v467 = vadd.f32 %v102, %v466
  %v468 = vpop.f32.mrb[0].mxu0
  %v469 = vadd.f32 %v106, %v468
  %v470 = vpop.f32.mrb[0].mxu0
  %v471 = vadd.f32 %v102, %v470
  %v472 = vpop.f32.mrb[0].mxu0
  %v473 = vadd.f32 %v106, %v472
  %474 = vmatprep.mubr.bf16.mxu0 0
  %475 = vmatmul.mubr.bf16.gmra.mrb[0].mxu0 %v144
  %v476 = vpop.f32.mrb[0].mxu0
  %v477 = vadd.f32 %v102, %v476
  %v478 = vpop.f32.mrb[0].mxu0
  %v479 = vadd.f32 %v106, %v478
  %v480 = vpop.f32.mrb[0].mxu0
  %v481 = vadd.f32 %v102, %v480
  %v482 = vpop.f32.mrb[0].mxu0
  %v483 = vadd.f32 %v106, %v482
  %484 = vmatprep.mubr.bf16.mxu0 0
  %485 = vmatmul.mubr.bf16.gmra.mrb[0].mxu0 %v145
  %v486 = vpop.f32.mrb[0].mxu0
  %v487 = vadd.f32 %v102, %v486
  %v488 = vpop.f32.mrb[0].mxu0
  %v489 = vadd.f32 %v106, %v488
  %v490 = vpop.f32.mrb[0].mxu0
  %v491 = vadd.f32 %v102, %v490
  %v492 = vpop.f32.mrb[0].mxu0
  %v493 = vadd.f32 %v106, %v492
  %494 = vmatprep.mubr.bf16.mxu0 0
  %495 = vmatmul.mubr.bf16.gmra.mrb[0].mxu0 %v146
  %v496 = vpop.f32.mrb[0].mxu0
  %v497 = vadd.f32 %v102, %v496
  %v498 = vpop.f32.mrb[0].mxu0
  %v499 = vadd.f32 %v106, %v498
  %v500 = vpop.f32.mrb[0].mxu0
  %v501 = vadd.f32 %v102, %v500
  %v502 = vpop.f32.mrb[0].mxu0
  %v503 = vadd.f32 %v106, %v502
  %504 = vmatprep.mubr.bf16.mxu0 0
  %505 = vmatmul.mubr.bf16.gmra.mrb[0].mxu0 %v147
  %v506 = vpop.f32.mrb[0].mxu0
  %v507 = vadd.f32 %v102, %v506
  %v508 = vpop.f32.mrb[0].mxu0
  %v509 = vadd.f32 %v106, %v508
  %v510 = vpop.f32.mrb[0].mxu0
  %v511 = vadd.f32 %v102, %v510
  %v512 = vpop.f32.mrb[0].mxu0
  %v513 = vadd.f32 %v106, %v512
  %514 = vmatprep.mubr.bf16.mxu0 0
  %515 = vmatmul.mubr.bf16.gmra.mrb[0].mxu0 %v148
  %v516 = vpop.f32.mrb[0].mxu0
  %v517 = vadd.f32 %v102, %v516
  %v518 = vpop.f32.mrb[0].mxu0
  %v519 = vadd.f32 %v106, %v518
  %v520 = vpop.f32.mrb[0].mxu0
  %v521 = vadd.f32 %v102, %v520
  %v522 = vpop.f32.mrb[0].mxu0
  %v523 = vadd.f32 %v106, %v522
  %524 = vmatprep.mubr.bf16.mxu0 0
  %525 = vmatmul.mubr.bf16.gmra.mrb[0].mxu0 %v149
  %v526 = vpop.f32.mrb[0].mxu0
  %v527 = vadd.f32 %v102, %v526
  %v528 = vpop.f32.mrb[0].mxu0
  %v529 = vadd.f32 %v106, %v528
  %v530 = vpop.f32.mrb[0].mxu0
  %v531 = vadd.f32 %v102, %v530
  %v532 = vpop.f32.mrb[0].mxu0
  %v533 = vadd.f32 %v106, %v532
  %534 = vmatprep.mubr.bf16.mxu0 0
  %535 = vmatmul.mubr.bf16.gmra.mrb[0].mxu0 %v150
  %v536 = vpop.f32.mrb[0].mxu0
  %v537 = vadd.f32 %v102, %v536
  %v538 = vpop.f32.mrb[0].mxu0
  %v539 = vadd.f32 %v106, %v538
  %v540 = vpop.f32.mrb[0].mxu0
  %v541 = vadd.f32 %v102, %v540
  %v542 = vpop.f32.mrb[0].mxu0
  %v543 = vadd.f32 %v106, %v542
  %544 = vdwg.mxu0
  %v545 = vmax.f32 %v354, 0.0
  %v546 = vmax.f32 %v356, 0.0
  %v547 = vmax.f32 %v467, 0.0
  %v548 = vmax.f32 %v469, 0.0
  %v549 = vmax.f32 %v358, 0.0
  %v550 = vmax.f32 %v360, 0.0
  %v551 = vmax.f32 %v471, 0.0
  %v552 = vmax.f32 %v473, 0.0
  %v553 = vmax.f32 %v364, 0.0
  %v554 = vmax.f32 %v366, 0.0
  %v555 = vmax.f32 %v477, 0.0
  %v556 = vmax.f32 %v479, 0.0
  %v557 = vmax.f32 %v368, 0.0
  %v558 = vmax.f32 %v370, 0.0
  %v559 = vmax.f32 %v481, 0.0
  %v560 = vmax.f32 %v483, 0.0
  %v561 = vmax.f32 %v374, 0.0
  %v562 = vmax.f32 %v376, 0.0
  %v563 = vmax.f32 %v487, 0.0
  %v564 = vmax.f32 %v489, 0.0
  %v565 = vmax.f32 %v378, 0.0
  %v566 = vmax.f32 %v380, 0.0
  %v567 = vmax.f32 %v491, 0.0
  %v568 = vmax.f32 %v493, 0.0
  %v569 = vmax.f32 %v384, 0.0
  %v570 = vmax.f32 %v386, 0.0
  %v571 = vmax.f32 %v497, 0.0
  %v572 = vmax.f32 %v499, 0.0
  %v573 = vmax.f32 %v388, 0.0
  %v574 = vmax.f32 %v390, 0.0
  %v575 = vmax.f32 %v501, 0.0
  %v576 = vmax.f32 %v503, 0.0
  %v577 = vmax.f32 %v394, 0.0
  %v578 = vmax.f32 %v396, 0.0
  %v579 = vmax.f32 %v507, 0.0
  %v580 = vmax.f32 %v509, 0.0
  %v581 = vmax.f32 %v398, 0.0
  %v582 = vmax.f32 %v400, 0.0
  %v583 = vmax.f32 %v511, 0.0
  %v584 = vmax.f32 %v513, 0.0
  %v585 = vmax.f32 %v404, 0.0
  %v586 = vmax.f32 %v406, 0.0
  %v587 = vmax.f32 %v517, 0.0
  %v588 = vmax.f32 %v519, 0.0
  %v589 = vmax.f32 %v408, 0.0
  %v590 = vmax.f32 %v410, 0.0
  %v591 = vmax.f32 %v521, 0.0
  %v592 = vmax.f32 %v523, 0.0
  %v593 = vmax.f32 %v414, 0.0
  %v594 = vmax.f32 %v416, 0.0
  %v595 = vmax.f32 %v527, 0.0
  %v596 = vmax.f32 %v529, 0.0
  %v597 = vmax.f32 %v418, 0.0
  %v598 = vmax.f32 %v420, 0.0
  %v599 = vmax.f32 %v531, 0.0
  %v600 = vmax.f32 %v533, 0.0
  %v601 = vmax.f32 %v424, 0.0
  %v602 = vmax.f32 %v426, 0.0
  %v603 = vmax.f32 %v537, 0.0
  %v604 = vmax.f32 %v539, 0.0
  %v605 = vmax.f32 %v428, 0.0
  %v606 = vmax.f32 %v430, 0.0
  %v607 = vmax.f32 %v541, 0.0
  %v608 = vmax.f32 %v543, 0.0
  %v609 = vld [vmem:[#allocation2] sm:$0xff]
  %v610 = vld [vmem:[#allocation2 + $0x8] sm:$0xff]
  %v611 = vld [vmem:[#allocation2 + $0x10] sm:$0xff]
  %v612 = vld [vmem:[#allocation2 + $0x18] sm:$0xff]
  %v613 = vld [vmem:[#allocation2 + $0x20] sm:$0xff]
  %v614 = vld [vmem:[#allocation2 + $0x28] sm:$0xff]
  %v615 = vld [vmem:[#allocation2 + $0x30] sm:$0xff]
  %v616 = vld [vmem:[#allocation2 + $0x38] sm:$0xff]
  %v617 = vld [vmem:[#allocation2 + $0x40] sm:$0xff]
  %v618 = vld [vmem:[#allocation2 + $0x48] sm:$0xff]
  %v619 = vld [vmem:[#allocation2 + $0x50] sm:$0xff]
  %v620 = vld [vmem:[#allocation2 + $0x58] sm:$0xff]
  %v621 = vld [vmem:[#allocation2 + $0x60] sm:$0xff]
  %v622 = vld [vmem:[#allocation2 + $0x68] sm:$0xff]
  %v623 = vld [vmem:[#allocation2 + $0x70] sm:$0xff]
  %v624 = vld [vmem:[#allocation2 + $0x78] sm:$0xff]
  %v625 = vpack.c.bf16 %v549, %v545
  %v626 = vpack.c.bf16 %v550, %v546
  %v627 = vpack.c.bf16 %v551, %v547
  %v628 = vpack.c.bf16 %v552, %v548
  %v629 = vpack.c.bf16 %v557, %v553
  %v630 = vpack.c.bf16 %v558, %v554
  %v631 = vpack.c.bf16 %v559, %v555
  %v632 = vpack.c.bf16 %v560, %v556
  %v633 = vpack.c.bf16 %v565, %v561
  %v634 = vpack.c.bf16 %v566, %v562
  %v635 = vpack.c.bf16 %v567, %v563
  %v636 = vpack.c.bf16 %v568, %v564
  %v637 = vpack.c.bf16 %v573, %v569
  %v638 = vpack.c.bf16 %v574, %v570
  %v639 = vpack.c.bf16 %v575, %v571
  %v640 = vpack.c.bf16 %v576, %v572
  %v641 = vpack.c.bf16 %v581, %v577
  %v642 = vpack.c.bf16 %v582, %v578
  %v643 = vpack.c.bf16 %v583, %v579
  %v644 = vpack.c.bf16 %v584, %v580
  %v645 = vpack.c.bf16 %v589, %v585
  %v646 = vpack.c.bf16 %v590, %v586
  %v647 = vpack.c.bf16 %v591, %v587
  %v648 = vpack.c.bf16 %v592, %v588
  %v649 = vpack.c.bf16 %v597, %v593
  %v650 = vpack.c.bf16 %v598, %v594
  %v651 = vpack.c.bf16 %v599, %v595
  %v652 = vpack.c.bf16 %v600, %v596
  %v653 = vpack.c.bf16 %v605, %v601
  %v654 = vpack.c.bf16 %v606, %v602
  %v655 = vpack.c.bf16 %v607, %v603
  %v656 = vpack.c.bf16 %v608, %v604
  %v657 = vld [vmem:[%s3] sm:$0xf]
  %v658 = vld [vmem:[%s3 + $0x4] sm:$0xf]
  %v659 = vld [vmem:[%s3 + $0x8] sm:$0xf]
  %v660 = vld [vmem:[%s3 + $0xc] sm:$0xf]
  %v661 = vld [vmem:[%s3 + $0x10] sm:$0xf]
  %v662 = vld [vmem:[%s3 + $0x14] sm:$0xf]
  %v663 = vld [vmem:[%s3 + $0x18] sm:$0xf]
  %v664 = vld [vmem:[%s3 + $0x1c] sm:$0xf]
  %v665 = vld [vmem:[%s3 + $0x20] sm:$0xf]
  %v666 = vld [vmem:[%s3 + $0x24] sm:$0xf]
  %v667 = vld [vmem:[%s3 + $0x28] sm:$0xf]
  %v668 = vld [vmem:[%s3 + $0x2c] sm:$0xf]
  %v669 = vld [vmem:[%s3 + $0x30] sm:$0xf]
  %v670 = vld [vmem:[%s3 + $0x34] sm:$0xf]
  %v671 = vld [vmem:[%s3 + $0x38] sm:$0xf]
  %v672 = vld [vmem:[%s3 + $0x3c] sm:$0xf]
  %v673 = vld [vmem:[%s3 + $0x40] sm:$0xf]
  %v674 = vld [vmem:[%s3 + $0x44] sm:$0xf]
  %v675 = vld [vmem:[%s3 + $0x48] sm:$0xf]
  %v676 = vld [vmem:[%s3 + $0x4c] sm:$0xf]
  %v677 = vld [vmem:[%s3 + $0x50] sm:$0xf]
  %v678 = vld [vmem:[%s3 + $0x54] sm:$0xf]
  %v679 = vld [vmem:[%s3 + $0x58] sm:$0xf]
  %v680 = vld [vmem:[%s3 + $0x5c] sm:$0xf]
  %v681 = vld [vmem:[%s3 + $0x60] sm:$0xf]
  %v682 = vld [vmem:[%s3 + $0x64] sm:$0xf]
  %v683 = vld [vmem:[%s3 + $0x68] sm:$0xf]
  %v684 = vld [vmem:[%s3 + $0x6c] sm:$0xf]
  %v685 = vld [vmem:[%s3 + $0x70] sm:$0xf]
  %v686 = vld [vmem:[%s3 + $0x74] sm:$0xf]
  %v687 = vld [vmem:[%s3 + $0x78] sm:$0xf]
  %v688 = vld [vmem:[%s3 + $0x7c] sm:$0xf]
  %v689 = vld [vmem:[%s3 + $0x80] sm:$0xf]
  %v690 = vld [vmem:[%s3 + $0x84] sm:$0xf]
  %v691 = vld [vmem:[%s3 + $0x88] sm:$0xf]
  %v692 = vld [vmem:[%s3 + $0x8c] sm:$0xf]
  %v693 = vld [vmem:[%s3 + $0x90] sm:$0xf]
  %v694 = vld [vmem:[%s3 + $0x94] sm:$0xf]
  %v695 = vld [vmem:[%s3 + $0x98] sm:$0xf]
  %v696 = vld [vmem:[%s3 + $0x9c] sm:$0xf]
  %v697 = vld [vmem:[%s3 + $0xa0] sm:$0xf]
  %v698 = vld [vmem:[%s3 + $0xa4] sm:$0xf]
  %v699 = vld [vmem:[%s3 + $0xa8] sm:$0xf]
  %v700 = vld [vmem:[%s3 + $0xac] sm:$0xf]
  %v701 = vld [vmem:[%s3 + $0xb0] sm:$0xf]
  %v702 = vld [vmem:[%s3 + $0xb4] sm:$0xf]
  %v703 = vld [vmem:[%s3 + $0xb8] sm:$0xf]
  %v704 = vld [vmem:[%s3 + $0xbc] sm:$0xf]
  %v705 = vld [vmem:[%s3 + $0xc0] sm:$0xf]
  %v706 = vld [vmem:[%s3 + $0xc4] sm:$0xf]
  %v707 = vld [vmem:[%s3 + $0xc8] sm:$0xf]
  %v708 = vld [vmem:[%s3 + $0xcc] sm:$0xf]
  %v709 = vld [vmem:[%s3 + $0xd0] sm:$0xf]
  %v710 = vld [vmem:[%s3 + $0xd4] sm:$0xf]
  %v711 = vld [vmem:[%s3 + $0xd8] sm:$0xf]
  %v712 = vld [vmem:[%s3 + $0xdc] sm:$0xf]
  %v713 = vld [vmem:[%s3 + $0xe0] sm:$0xf]
  %v714 = vld [vmem:[%s3 + $0xe4] sm:$0xf]
  %v715 = vld [vmem:[%s3 + $0xe8] sm:$0xf]
  %v716 = vld [vmem:[%s3 + $0xec] sm:$0xf]
  %v717 = vld [vmem:[%s3 + $0xf0] sm:$0xf]
  %v718 = vld [vmem:[%s3 + $0xf4] sm:$0xf]
  %v719 = vld [vmem:[%s3 + $0xf8] sm:$0xf]
  %v720 = vld [vmem:[%s3 + $0xfc] sm:$0xf]
  %v785 = vunpack.c.l.b16 %v657
  %v786 = vunpack.c.l.b16 %v658
  %v787 = vunpack.c.l.b16 %v659
  %v788 = vunpack.c.l.b16 %v660
  %v789 = vunpack.c.l.b16 %v661
  %v790 = vunpack.c.l.b16 %v662
  %v791 = vunpack.c.l.b16 %v663
  %v792 = vunpack.c.l.b16 %v664
  %v793 = vunpack.c.l.b16 %v665
  %v794 = vunpack.c.l.b16 %v666
  %v795 = vunpack.c.l.b16 %v667
  %v796 = vunpack.c.l.b16 %v668
  %v797 = vunpack.c.l.b16 %v669
  %v798 = vunpack.c.l.b16 %v670
  %v799 = vunpack.c.l.b16 %v671
  %v800 = vunpack.c.l.b16 %v672
  %v801 = vunpack.c.l.b16 %v673
  %v802 = vunpack.c.l.b16 %v674
  %v803 = vunpack.c.l.b16 %v675
  %v804 = vunpack.c.l.b16 %v676
  %v805 = vunpack.c.l.b16 %v677
  %v806 = vunpack.c.l.b16 %v678
  %v807 = vunpack.c.l.b16 %v679
  %v808 = vunpack.c.l.b16 %v680
  %v809 = vunpack.c.l.b16 %v681
  %v810 = vunpack.c.l.b16 %v682
  %v811 = vunpack.c.l.b16 %v683
  %v812 = vunpack.c.l.b16 %v684
  %v813 = vunpack.c.l.b16 %v685
  %v814 = vunpack.c.l.b16 %v686
  %v815 = vunpack.c.l.b16 %v687
  %v816 = vunpack.c.l.b16 %v688
  %v817 = vunpack.c.l.b16 %v689
  %v818 = vunpack.c.l.b16 %v690
  %v819 = vunpack.c.l.b16 %v691
  %v820 = vunpack.c.l.b16 %v692
  %v821 = vunpack.c.l.b16 %v693
  %v822 = vunpack.c.l.b16 %v694
  %v823 = vunpack.c.l.b16 %v695
  %v824 = vunpack.c.l.b16 %v696
  %v825 = vunpack.c.l.b16 %v697
  %v826 = vunpack.c.l.b16 %v698
  %v827 = vunpack.c.l.b16 %v699
  %v828 = vunpack.c.l.b16 %v700
  %v829 = vunpack.c.l.b16 %v701
  %v830 = vunpack.c.l.b16 %v702
  %v831 = vunpack.c.l.b16 %v703
  %v832 = vunpack.c.l.b16 %v704
  %v833 = vunpack.c.l.b16 %v705
  %v834 = vunpack.c.l.b16 %v706
  %v835 = vunpack.c.l.b16 %v707
  %v836 = vunpack.c.l.b16 %v708
  %v837 = vunpack.c.l.b16 %v709
  %v838 = vunpack.c.l.b16 %v710
  %v839 = vunpack.c.l.b16 %v711
  %v840 = vunpack.c.l.b16 %v712
  %v841 = vunpack.c.l.b16 %v713
  %v842 = vunpack.c.l.b16 %v714
  %v843 = vunpack.c.l.b16 %v715
  %v844 = vunpack.c.l.b16 %v716
  %v845 = vunpack.c.l.b16 %v717
  %v846 = vunpack.c.l.b16 %v718
  %v847 = vunpack.c.l.b16 %v719
  %v848 = vunpack.c.l.b16 %v720
  %v849 = vpack.c.b16 %v786, %v785
  %v850 = vpack.c.b16 %v788, %v787
  %v851 = vpack.c.b16 %v790, %v789
  %v852 = vpack.c.b16 %v792, %v791
  %v853 = vpack.c.b16 %v794, %v793
  %v854 = vpack.c.b16 %v796, %v795
  %v855 = vpack.c.b16 %v798, %v797
  %v856 = vpack.c.b16 %v800, %v799
  %v857 = vpack.c.b16 %v802, %v801
  %v858 = vpack.c.b16 %v804, %v803
  %v859 = vpack.c.b16 %v806, %v805
  %v860 = vpack.c.b16 %v808, %v807
  %v861 = vpack.c.b16 %v810, %v809
  %v862 = vpack.c.b16 %v812, %v811
  %v863 = vpack.c.b16 %v814, %v813
  %v864 = vpack.c.b16 %v816, %v815
  %v865 = vpack.c.b16 %v818, %v817
  %v866 = vpack.c.b16 %v820, %v819
  %v867 = vpack.c.b16 %v822, %v821
  %v868 = vpack.c.b16 %v824, %v823
  %v869 = vpack.c.b16 %v826, %v825
  %v870 = vpack.c.b16 %v828, %v827
  %v871 = vpack.c.b16 %v830, %v829
  %v872 = vpack.c.b16 %v832, %v831
  %v873 = vpack.c.b16 %v834, %v833
  %v874 = vpack.c.b16 %v836, %v835
  %v875 = vpack.c.b16 %v838, %v837
  %v876 = vpack.c.b16 %v840, %v839
  %v877 = vpack.c.b16 %v842, %v841
  %v878 = vpack.c.b16 %v844, %v843
  %v879 = vpack.c.b16 %v846, %v845
  %v880 = vpack.c.b16 %v848, %v847
  %913 = vmatprep.subr.bf16.mxu0 0
  %914 = vmatpush1.bf16.msra.mxu0 %v849
  %915 = vmatprep.subr.bf16.mxu0 0
  %916 = vmatpush1.bf16.msra.mxu0 %v850
  %917 = vmatprep.subr.bf16.mxu0 0
  %918 = vmatpush1.bf16.msra.mxu0 %v851
  %919 = vmatprep.subr.bf16.mxu0 0
  %920 = vmatpush1.bf16.msra.mxu0 %v852
  %921 = vmatprep.subr.bf16.mxu0 0
  %922 = vmatpush1.bf16.msra.mxu0 %v853
  %923 = vmatprep.subr.bf16.mxu0 0
  %924 = vmatpush1.bf16.msra.mxu0 %v854
  %925 = vmatprep.subr.bf16.mxu0 0
  %926 = vmatpush1.bf16.msra.mxu0 %v855
  %927 = vmatprep.subr.bf16.mxu0 0
  %928 = vmatpush1.bf16.msra.mxu0 %v856
  %929 = vmatprep.subr.bf16.mxu0 0
  %930 = vmatpush1.bf16.msra.mxu0 %v857
  %931 = vmatprep.subr.bf16.mxu0 0
  %932 = vmatpush1.bf16.msra.mxu0 %v858
  %933 = vmatprep.subr.bf16.mxu0 0
  %934 = vmatpush1.bf16.msra.mxu0 %v859
  %935 = vmatprep.subr.bf16.mxu0 0
  %936 = vmatpush1.bf16.msra.mxu0 %v860
  %937 = vmatprep.subr.bf16.mxu0 0
  %938 = vmatpush1.bf16.msra.mxu0 %v861
  %939 = vmatprep.subr.bf16.mxu0 0
  %940 = vmatpush1.bf16.msra.mxu0 %v862
  %941 = vmatprep.subr.bf16.mxu0 0
  %942 = vmatpush1.bf16.msra.mxu0 %v863
  %943 = vmatprep.subr.bf16.mxu0 0
  %944 = vmatpush1.bf16.msra.mxu0 %v864
  %945 = vmatprep.mubr.bf16.mxu0 %v626
  %946 = vmatmul.mubr.bf16.gmra.mrb[0].mxu0 %v625
  %v947 = vpop.f32.mrb[0].mxu0
  %v948 = vadd.f32 0.0, %v947
  %v949 = vpop.f32.mrb[0].mxu0
  %v950 = vpop.f32.mrb[0].mxu0
  %v951 = vadd.f32 0.0, %v950
  %v952 = vpop.f32.mrb[0].mxu0
  %953 = vmatprep.mubr.bf16.mxu0 %v630
  %954 = vmatmul.mubr.bf16.gmra.mrb[0].mxu0 %v629
  %v955 = vpop.f32.mrb[0].mxu0
  %v956 = vadd.f32 0.0, %v955
  %v957 = vpop.f32.mrb[0].mxu0
  %v958 = vpop.f32.mrb[0].mxu0
  %v959 = vadd.f32 0.0, %v958
  %v960 = vpop.f32.mrb[0].mxu0
  %961 = vmatprep.mubr.bf16.mxu0 %v634
  %962 = vmatmul.mubr.bf16.gmra.mrb[0].mxu0 %v633
  %v963 = vpop.f32.mrb[0].mxu0
  %v964 = vadd.f32 0.0, %v963
  %v965 = vpop.f32.mrb[0].mxu0
  %v966 = vpop.f32.mrb[0].mxu0
  %v967 = vadd.f32 0.0, %v966
  %v968 = vpop.f32.mrb[0].mxu0
  %969 = vmatprep.mubr.bf16.mxu0 %v638
  %970 = vmatmul.mubr.bf16.gmra.mrb[0].mxu0 %v637
  %v971 = vpop.f32.mrb[0].mxu0
  %v972 = vadd.f32 0.0, %v971
  %v973 = vpop.f32.mrb[0].mxu0
  %v974 = vpop.f32.mrb[0].mxu0
  %v975 = vadd.f32 0.0, %v974
  %v976 = vpop.f32.mrb[0].mxu0
  %977 = vmatprep.mubr.bf16.mxu0 %v642
  %978 = vmatmul.mubr.bf16.gmra.mrb[0].mxu0 %v641
  %v979 = vpop.f32.mrb[0].mxu0
  %v980 = vadd.f32 0.0, %v979
  %v981 = vpop.f32.mrb[0].mxu0
  %v982 = vpop.f32.mrb[0].mxu0
  %v983 = vadd.f32 0.0, %v982
  %v984 = vpop.f32.mrb[0].mxu0
  %985 = vmatprep.mubr.bf16.mxu0 %v646
  %986 = vmatmul.mubr.bf16.gmra.mrb[0].mxu0 %v645
  %v987 = vpop.f32.mrb[0].mxu0
  %v988 = vadd.f32 0.0, %v987
  %v989 = vpop.f32.mrb[0].mxu0
  %v990 = vpop.f32.mrb[0].mxu0
  %v991 = vadd.f32 0.0, %v990
  %v992 = vpop.f32.mrb[0].mxu0
  %993 = vmatprep.mubr.bf16.mxu0 %v650
  %994 = vmatmul.mubr.bf16.gmra.mrb[0].mxu0 %v649
  %v995 = vpop.f32.mrb[0].mxu0
  %v996 = vadd.f32 0.0, %v995
  %v997 = vpop.f32.mrb[0].mxu0
  %v998 = vpop.f32.mrb[0].mxu0
  %v999 = vadd.f32 0.0, %v998
  %v1000 = vpop.f32.mrb[0].mxu0
  %1001 = vmatprep.mubr.bf16.mxu0 %v654
  %1002 = vmatmul.mubr.bf16.gmra.mrb[0].mxu0 %v653
  %v1003 = vpop.f32.mrb[0].mxu0
  %v1004 = vadd.f32 0.0, %v1003
  %v1005 = vpop.f32.mrb[0].mxu0
  %v1006 = vpop.f32.mrb[0].mxu0
  %v1007 = vadd.f32 0.0, %v1006
  %v1008 = vpop.f32.mrb[0].mxu0
  %1009 = vdwg.mxu0
  %1010 = vmatprep.subr.bf16.mxu0 0
  %1011 = vmatpush1.bf16.msra.mxu0 %v865
  %1012 = vmatprep.subr.bf16.mxu0 0
  %1013 = vmatpush1.bf16.msra.mxu0 %v866
  %1014 = vmatprep.subr.bf16.mxu0 0
  %1015 = vmatpush1.bf16.msra.mxu0 %v867
  %1016 = vmatprep.subr.bf16.mxu0 0
  %1017 = vmatpush1.bf16.msra.mxu0 %v868
  %1018 = vmatprep.subr.bf16.mxu0 0
  %1019 = vmatpush1.bf16.msra.mxu0 %v869
  %1020 = vmatprep.subr.bf16.mxu0 0
  %1021 = vmatpush1.bf16.msra.mxu0 %v870
  %1022 = vmatprep.subr.bf16.mxu0 0
  %1023 = vmatpush1.bf16.msra.mxu0 %v871
  %1024 = vmatprep.subr.bf16.mxu0 0
  %1025 = vmatpush1.bf16.msra.mxu0 %v872
  %1026 = vmatprep.subr.bf16.mxu0 0
  %1027 = vmatpush1.bf16.msra.mxu0 %v873
  %1028 = vmatprep.subr.bf16.mxu0 0
  %1029 = vmatpush1.bf16.msra.mxu0 %v874
  %1030 = vmatprep.subr.bf16.mxu0 0
  %1031 = vmatpush1.bf16.msra.mxu0 %v875
  %1032 = vmatprep.subr.bf16.mxu0 0
  %1033 = vmatpush1.bf16.msra.mxu0 %v876
  %1034 = vmatprep.subr.bf16.mxu0 0
  %1035 = vmatpush1.bf16.msra.mxu0 %v877
  %1036 = vmatprep.subr.bf16.mxu0 0
  %1037 = vmatpush1.bf16.msra.mxu0 %v878
  %1038 = vmatprep.subr.bf16.mxu0 0
  %1039 = vmatpush1.bf16.msra.mxu0 %v879
  %1040 = vmatprep.subr.bf16.mxu0 0
  %1041 = vmatpush1.bf16.msra.mxu0 %v880
  %1042 = vmatprep.mubr.bf16.mxu0 %v628
  %1043 = vmatmul.mubr.bf16.gmra.mrb[0].mxu0 %v627
  %v1044 = vpop.f32.mrb[0].mxu0
  %v1045 = vadd.f32 %v948, %v1044
  %v1046 = vpop.f32.mrb[0].mxu0
  %v1047 = vpop.f32.mrb[0].mxu0
  %v1048 = vadd.f32 %v951, %v1047
  %v1049 = vpop.f32.mrb[0].mxu0
  %1050 = vmatprep.mubr.bf16.mxu0 %v632
  %1051 = vmatmul.mubr.bf16.gmra.mrb[0].mxu0 %v631
  %v1052 = vpop.f32.mrb[0].mxu0
  %v1053 = vadd.f32 %v956, %v1052
  %v1054 = vpop.f32.mrb[0].mxu0
  %v1055 = vpop.f32.mrb[0].mxu0
  %v1056 = vadd.f32 %v959, %v1055
  %v1057 = vpop.f32.mrb[0].mxu0
  %1058 = vmatprep.mubr.bf16.mxu0 %v636
  %1059 = vmatmul.mubr.bf16.gmra.mrb[0].mxu0 %v635
  %v1060 = vpop.f32.mrb[0].mxu0
  %v1061 = vadd.f32 %v964, %v1060
  %v1062 = vpop.f32.mrb[0].mxu0
  %v1063 = vpop.f32.mrb[0].mxu0
  %v1064 = vadd.f32 %v967, %v1063
  %v1065 = vpop.f32.mrb[0].mxu0
  %1066 = vmatprep.mubr.bf16.mxu0 %v640
  %1067 = vmatmul.mubr.bf16.gmra.mrb[0].mxu0 %v639
  %v1068 = vpop.f32.mrb[0].mxu0
  %v1069 = vadd.f32 %v972, %v1068
  %v1070 = vpop.f32.mrb[0].mxu0
  %v1071 = vpop.f32.mrb[0].mxu0
  %v1072 = vadd.f32 %v975, %v1071
  %v1073 = vpop.f32.mrb[0].mxu0
  %1074 = vmatprep.mubr.bf16.mxu0 %v644
  %1075 = vmatmul.mubr.bf16.gmra.mrb[0].mxu0 %v643
  %v1076 = vpop.f32.mrb[0].mxu0
  %v1077 = vadd.f32 %v980, %v1076
  %v1078 = vpop.f32.mrb[0].mxu0
  %v1079 = vpop.f32.mrb[0].mxu0
  %v1080 = vadd.f32 %v983, %v1079
  %v1081 = vpop.f32.mrb[0].mxu0
  %1082 = vmatprep.mubr.bf16.mxu0 %v648
  %1083 = vmatmul.mubr.bf16.gmra.mrb[0].mxu0 %v647
  %v1084 = vpop.f32.mrb[0].mxu0
  %v1085 = vadd.f32 %v988, %v1084
  %v1086 = vpop.f32.mrb[0].mxu0
  %v1087 = vpop.f32.mrb[0].mxu0
  %v1088 = vadd.f32 %v991, %v1087
  %v1089 = vpop.f32.mrb[0].mxu0
  %1090 = vmatprep.mubr.bf16.mxu0 %v652
  %1091 = vmatmul.mubr.bf16.gmra.mrb[0].mxu0 %v651
  %v1092 = vpop.f32.mrb[0].mxu0
  %v1093 = vadd.f32 %v996, %v1092
  %v1094 = vpop.f32.mrb[0].mxu0
  %v1095 = vpop.f32.mrb[0].mxu0
  %v1096 = vadd.f32 %v999, %v1095
  %v1097 = vpop.f32.mrb[0].mxu0
  %1098 = vmatprep.mubr.bf16.mxu0 %v656
  %1099 = vmatmul.mubr.bf16.gmra.mrb[0].mxu0 %v655
  %v1100 = vpop.f32.mrb[0].mxu0
  %v1101 = vadd.f32 %v1004, %v1100
  %v1102 = vpop.f32.mrb[0].mxu0
  %v1103 = vpop.f32.mrb[0].mxu0
  %v1104 = vadd.f32 %v1007, %v1103
  %v1105 = vpop.f32.mrb[0].mxu0
  %1106 = vdwg.mxu0
  %v1107 = vadd.f32 %v609, %v1045
  %v1108 = vadd.f32 %v610, %v1048
  %v1109 = vadd.f32 %v611, %v1053
  %v1110 = vadd.f32 %v612, %v1056
  %v1111 = vadd.f32 %v613, %v1061
  %v1112 = vadd.f32 %v614, %v1064
  %v1113 = vadd.f32 %v615, %v1069
  %v1114 = vadd.f32 %v616, %v1072
  %v1115 = vadd.f32 %v617, %v1077
  %v1116 = vadd.f32 %v618, %v1080
  %v1117 = vadd.f32 %v619, %v1085
  %v1118 = vadd.f32 %v620, %v1088
  %v1119 = vadd.f32 %v621, %v1093
  %v1120 = vadd.f32 %v622, %v1096
  %v1121 = vadd.f32 %v623, %v1101
  %v1122 = vadd.f32 %v624, %v1104
  %1123 = vst [vmem:[#allocation2] sm:$0xff] %v1107
  %1124 = vst [vmem:[#allocation2 + $0x8] sm:$0xff] %v1108
  %1125 = vst [vmem:[#allocation2 + $0x10] sm:$0xff] %v1109
  %1126 = vst [vmem:[#allocation2 + $0x18] sm:$0xff] %v1110
  %1127 = vst [vmem:[#allocation2 + $0x20] sm:$0xff] %v1111
  %1128 = vst [vmem:[#allocation2 + $0x28] sm:$0xff] %v1112
  %1129 = vst [vmem:[#allocation2 + $0x30] sm:$0xff] %v1113
  %1130 = vst [vmem:[#allocation2 + $0x38] sm:$0xff] %v1114
  %1131 = vst [vmem:[#allocation2 + $0x40] sm:$0xff] %v1115
  %1132 = vst [vmem:[#allocation2 + $0x48] sm:$0xff] %v1116
  %1133 = vst [vmem:[#allocation2 + $0x50] sm:$0xff] %v1117
  %1134 = vst [vmem:[#allocation2 + $0x58] sm:$0xff] %v1118
  %1135 = vst [vmem:[#allocation2 + $0x60] sm:$0xff] %v1119
  %1136 = vst [vmem:[#allocation2 + $0x68] sm:$0xff] %v1120
  %1137 = vst [vmem:[#allocation2 + $0x70] sm:$0xff] %v1121
  %1138 = vst [vmem:[#allocation2 + $0x78] sm:$0xff] %v1122
  // Predicated region
  $region26: #{positionwise_feed_forward.1} parent=0 // pred_check
    %p1139 = pneg %p21
  $region27: #{positionwise_feed_forward.1} parent=0 // pred_check_branch
    %1141 = sbr.rel (%p1139) target = $region29
  $region28: #{positionwise_feed_forward.1} parent=0 // pred_region
    %v1142 = vld [vmem:[#allocation2] sm:$0xff]
    %v1143 = vld [vmem:[#allocation2 + $0x8] sm:$0xff]
    %v1144 = vld [vmem:[#allocation2 + $0x10] sm:$0xff]
    %v1145 = vld [vmem:[#allocation2 + $0x18] sm:$0xff]
    %v1146 = vld [vmem:[#allocation2 + $0x20] sm:$0xff]
    %v1147 = vld [vmem:[#allocation2 + $0x28] sm:$0xff]
    %v1148 = vld [vmem:[#allocation2 + $0x30] sm:$0xff]
    %v1149 = vld [vmem:[#allocation2 + $0x38] sm:$0xff]
    %v1150 = vld [vmem:[#allocation2 + $0x40] sm:$0xff]
    %v1151 = vld [vmem:[#allocation2 + $0x48] sm:$0xff]
    %v1152 = vld [vmem:[#allocation2 + $0x50] sm:$0xff]
    %v1153 = vld [vmem:[#allocation2 + $0x58] sm:$0xff]
    %v1154 = vld [vmem:[#allocation2 + $0x60] sm:$0xff]
    %v1155 = vld [vmem:[#allocation2 + $0x68] sm:$0xff]
    %v1156 = vld [vmem:[#allocation2 + $0x70] sm:$0xff]
    %v1157 = vld [vmem:[#allocation2 + $0x78] sm:$0xff]
    %v1158 = vld [vmem:[%s4] sm:$0x1]
    %v1160 = vlaneseq
    %v1161 = vshrl.u32 %v1160, 7
    %v1162 = vsub.s32 0, %v1161
    %v1163 = vrot.slane %v1158, %v1162
    %v1165 = vadd.f32 %v1142, %v1163
    %v1166 = vadd.f32 %v1143, %v1163
    %v1167 = vadd.f32 %v1144, %v1163
    %v1168 = vadd.f32 %v1145, %v1163
    %v1169 = vadd.f32 %v1146, %v1163
    %v1170 = vadd.f32 %v1147, %v1163
    %v1171 = vadd.f32 %v1148, %v1163
    %v1172 = vadd.f32 %v1149, %v1163
    %v1173 = vadd.f32 %v1150, %v1163
    %v1174 = vadd.f32 %v1151, %v1163
    %v1175 = vadd.f32 %v1152, %v1163
    %v1176 = vadd.f32 %v1153, %v1163
    %v1177 = vadd.f32 %v1154, %v1163
    %v1178 = vadd.f32 %v1155, %v1163
    %v1179 = vadd.f32 %v1156, %v1163
    %v1180 = vadd.f32 %v1157, %v1163
    %1181 = vst [vmem:[%s5] sm:$0xff] %v1165
    %1182 = vst [vmem:[%s5 + $0x8] sm:$0xff] %v1166
    %1183 = vst [vmem:[%s5 + $0x10] sm:$0xff] %v1167
    %1184 = vst [vmem:[%s5 + $0x18] sm:$0xff] %v1168
    %1185 = vst [vmem:[%s5 + $0x20] sm:$0xff] %v1169
    %1186 = vst [vmem:[%s5 + $0x28] sm:$0xff] %v1170
    %1187 = vst [vmem:[%s5 + $0x30] sm:$0xff] %v1171
    %1188 = vst [vmem:[%s5 + $0x38] sm:$0xff] %v1172
    %1189 = vst [vmem:[%s5 + $0x40] sm:$0xff] %v1173
    %1190 = vst [vmem:[%s5 + $0x48] sm:$0xff] %v1174
    %1191 = vst [vmem:[%s5 + $0x50] sm:$0xff] %v1175
    %1192 = vst [vmem:[%s5 + $0x58] sm:$0xff] %v1176
    %1193 = vst [vmem:[%s5 + $0x60] sm:$0xff] %v1177
    %1194 = vst [vmem:[%s5 + $0x68] sm:$0xff] %v1178
    %1195 = vst [vmem:[%s5 + $0x70] sm:$0xff] %v1179
    %1196 = vst [vmem:[%s5 + $0x78] sm:$0xff] %v1180
  $region29: #{positionwise_feed_forward.1} parent=0 // pred_fallthru
    _
  // Predicated region
  $region30: #{positionwise_feed_forward.1} parent=0 // pred_check
    _
  $region31: #{positionwise_feed_forward.1} parent=0 // pred_check_branch
    %1198 = sbr.rel (0) target = $region33
  $region32: #{positionwise_feed_forward.1} parent=0 // pred_region
    _
  $region33: #{positionwise_feed_forward.1} parent=0 // pred_fallthru
    _
  // Predicated region
  $region34: #{positionwise_feed_forward.1} parent=0 // pred_check
    _
  $region35: #{positionwise_feed_forward.1} parent=0 // pred_check_branch
    %1200 = sbr.rel (0) target = $region37
  $region36: #{positionwise_feed_forward.1} parent=0 // pred_region
    _
  $region37: #{positionwise_feed_forward.1} parent=0 // pred_fallthru
    _

</llo_original>
